<compile_context>
chip_gen: v7x
topology: tpu7x:2x2x1
jax: 0.10.0
libtpu: 0.0.40
codegen_flags: <defaults>
</compile_context>

<pallas_src>
import functools
import math

import jax
import jax.numpy as jnp
from jax import lax
from jax.experimental import pallas as pl
from jax.experimental.pallas import tpu as pltpu

DIS_NEGSLOPE = 0.2
BN_EPS = 1e-5
_LANE = 128
_SUBLANE = 8
_WEIGHT_RESIDENT_BYTES = 4 * 1024 * 1024   # keep W fully VMEM-resident below this size
_VMEM_CAP = 40 * 1024 * 1024               # v7x has 64 MiB / TensorCore; leave headroom
_VMEM_FLOOR = 16 * 1024 * 1024


def _cdiv(a, b):
    return -(-a // b)


def _round_up(x, mult):
    return _cdiv(x, mult) * mult


def _vmem_limit(double_buffered_bytes, single_bytes=0):
    est = 2 * double_buffered_bytes + single_bytes + 8 * 1024 * 1024  # slack
    return int(max(_VMEM_FLOOR, min(est, _VMEM_CAP)))


def _conv_stats_kernel(p_ref, w_ref, b_ref, o_ref, stats_ref, acc_ref, *,
                       m_valid, tm, tk, k_tiles, w_resident):
    """bf16 MXU matmul with an f32 VMEM accumulator.  Epilogue: + conv bias, bf16 store of
    the activations (compact Cout), and per-M-tile masked sum / sum-of-squares rows for BN."""
    i = pl.program_id(0)
    kk = pl.program_id(1)

    @pl.when(kk == 0)
    def _():
        acc_ref[...] = jnp.zeros_like(acc_ref)

    if w_resident and k_tiles > 1:
        # Whole weight matrix is VMEM-resident; slice the current K chunk in-kernel.
        k0 = pl.multiple_of(kk * tk, tk)
        w_blk = w_ref[pl.ds(k0, tk), :]
    else:
        w_blk = w_ref[...]
    acc_ref[...] += jnp.dot(p_ref[...], w_blk, preferred_element_type=jnp.float32)

    @pl.when(kk == k_tiles - 1)
    def _():
        y = acc_ref[...] + b_ref[...]                 # f32
        o_ref[...] = y.astype(o_ref.dtype)            # bf16 intermediate store
        # (tm, 1) row mask: exclude M-padding rows from the batch statistics.
        row = i * tm + lax.broadcasted_iota(jnp.int32, (tm, 1), 0)
        ym = y * (row < m_valid).astype(jnp.float32)
        s = jnp.sum(ym, axis=0, keepdims=True)
        q = jnp.sum(ym * ym, axis=0, keepdims=True)
        # NOTE: variance is later formed as E[y^2]-E[y]^2 in f32; fine at BN scales, can
        # cancel if |mean| >> std (documented correctness caveat).
        lane_rows = lax.broadcasted_iota(jnp.int32, (_SUBLANE, 1), 0)
        stats_ref[...] = jnp.where(lane_rows == 0, s,
                                   jnp.where(lane_rows == 1, q, 0.0))


def _bn_lrelu_kernel(y_ref, stats_ref, gamma_ref, beta_ref, o_ref, *, inv_m):
    """Finalize batch statistics from the tiny per-tile partial slab (constant-index input)
    and apply the per-channel affine + LeakyReLU(0.2), all in f32 (no bf16 VPU on v5e)."""
    st = stats_ref[...]                                            # (m_tiles*8, cout) f32
    rows = lax.broadcasted_iota(jnp.int32, (st.shape[0], 1), 0)
    sub = jnp.bitwise_and(rows, _SUBLANE - 1)
    total = jnp.sum(jnp.where(sub == 0, st, 0.0), axis=0, keepdims=True)
    total_sq = jnp.sum(jnp.where(sub == 1, st, 0.0), axis=0, keepdims=True)
    mean = total * inv_m
    var = jnp.maximum(total_sq * inv_m - mean * mean, 0.0)         # biased var (training fwd)
    inv_std = lax.rsqrt(var + BN_EPS)
    scale = gamma_ref[...] * inv_std
    shift = beta_ref[...] - mean * scale
    yn = y_ref[...].astype(jnp.float32) * scale + shift
    o_ref[...] = jnp.where(yn >= 0.0, yn, DIS_NEGSLOPE * yn)


@functools.partial(jax.jit, static_argnames=("stride", "padding", "tm", "tk"))
def dis_conv_forward(x_nchw, conv_w, conv_b, bn_gamma, bn_beta, *,
                     stride, padding, tm=1024, tk=512):
    n, cin, h, w = x_nchw.shape
    cout, _, kh, kw = conv_w.shape
    oh = (h + 2 * padding - kh) // stride + 1
    ow = (w + 2 * padding - kw) // stride + 1
    m = n * oh * ow
    k = cin * kh * kw

    # ---- M tiling: balanced tiles, >=2 tiles when possible (v7x megacore sharding) ----
    tm = min(tm, _round_up(m, _SUBLANE))
    m_tiles = _cdiv(m, tm)
    if m_tiles == 1 and m >= 2 * _SUBLANE:
        m_tiles = 2
    tm = _round_up(_cdiv(m, m_tiles), _SUBLANE)
    m_pad = m_tiles * tm

    # ---- K tiling: lane-aligned, balanced ----
    k_pad = _round_up(k, _LANE)
    if k_pad <= tk:
        tk, k_tiles = k_pad, 1
    else:
        k_tiles = _cdiv(k_pad, tk)
        tk = _round_up(_cdiv(k_pad, k_tiles), _LANE)
        k_pad = tk * k_tiles

    w_resident = (k_pad * cout * 2) <= _WEIGHT_RESIDENT_BYTES

    # ---- im2col (bf16) outside the kernels; explicit tap order = (kh, kw, cin). ----
    # TODO(synk): fuse this patch extraction into the matmul grid (per-tap reduction axis)
    #             to remove the HBM-materialized patch slab entirely.
    x_nhwc = jnp.transpose(x_nchw, (0, 2, 3, 1)).astype(jnp.bfloat16)
    x_padded = jnp.pad(x_nhwc,
                       ((0, 0), (padding, padding), (padding, padding), (0, 0)))
    taps = [x_padded[:,
                     dy:dy + (oh - 1) * stride + 1:stride,
                     dx:dx + (ow - 1) * stride + 1:stride, :]
            for dy in range(kh) for dx in range(kw)]
    patches = jnp.concatenate(taps, axis=-1).reshape(m, k)
    patches = jnp.pad(patches, ((0, m_pad - m), (0, k_pad - k)))

    # Weights to (K, Cout) in matching (kh, kw, cin) order; bf16, compact (un-padded) Cout.
    wmat = jnp.transpose(conv_w, (2, 3, 1, 0)).reshape(k, cout).astype(jnp.bfloat16)
    wmat = jnp.pad(wmat, ((0, k_pad - k), (0, 0)))
    brow = conv_b.astype(jnp.float32).reshape(1, cout)

    # ---- per-step VMEM footprint (lane-padded for sizing only) ----
    cout_vmem = _round_up(cout, _LANE)
    k1_dbuf = (tm * tk * 2                                          # LHS tile (bf16)
               + (k_pad if w_resident else tk) * cout_vmem * 2      # weights (bf16)
               + tm * cout_vmem * 2                                  # conv-out tile (bf16)
               + _SUBLANE * cout_vmem * 4                            # stats tile
               + _SUBLANE * cout_vmem * 4)                           # bias row
    k1_vmem = _vmem_limit(k1_dbuf, tm * cout_vmem * 4)               # + f32 accumulator

    # ---- kernel 1: tiled conv matmul + bias + fused BN partial stats ----
    conv_out, stats = pl.pallas_call(
        functools.partial(_conv_stats_kernel, m_valid=m, tm=tm, tk=tk,
                          k_tiles=k_tiles, w_resident=w_resident),
        out_shape=(
            jax.ShapeDtypeStruct((m_pad, cout), jnp.bfloat16),
            jax.ShapeDtypeStruct((m_tiles * _SUBLANE, cout), jnp.float32),
        ),
        grid_spec=pltpu.PrefetchScalarGridSpec(
            num_scalar_prefetch=0,
            grid=(m_tiles, k_tiles),
            in_specs=[
                pl.BlockSpec((tm, tk), lambda i, kk: (i, kk)),
                (pl.BlockSpec((k_pad, cout), lambda i, kk: (0, 0)) if w_resident
                 else pl.BlockSpec((tk, cout), lambda i, kk: (kk, 0))),
                pl.BlockSpec((1, cout), lambda i, kk: (0, 0)),
            ],
            out_specs=(
                pl.BlockSpec((tm, cout), lambda i, kk: (i, 0)),
                pl.BlockSpec((_SUBLANE, cout), lambda i, kk: (i, 0)),
            ),
            scratch_shapes=[pltpu.VMEM((tm, cout), jnp.float32)],
        ),
        compiler_params=pltpu.CompilerParams(
            dimension_semantics=("parallel", "arbitrary"),
            vmem_limit_bytes=k1_vmem),
    )(patches, wmat, brow)

    # ---- kernel 2: stats finalize (in-kernel) + normalize + LeakyReLU, tiled over M ----
    gamma_row = bn_gamma.astype(jnp.float32).reshape(1, cout)
    beta_row = bn_beta.astype(jnp.float32).reshape(1, cout)
    k2_dbuf = (tm * cout_vmem * 2
               + m_tiles * _SUBLANE * cout_vmem * 4
               + 2 * _SUBLANE * cout_vmem * 4
               + tm * cout_vmem * 4)
    k2_vmem = _vmem_limit(k2_dbuf)

    y = pl.pallas_call(
        functools.partial(_bn_lrelu_kernel, inv_m=1.0 / m),
        out_shape=jax.ShapeDtypeStruct((m_pad, cout), jnp.float32),
        grid_spec=pltpu.PrefetchScalarGridSpec(
            num_scalar_prefetch=0,
            grid=(m_tiles,),
            in_specs=[
                pl.BlockSpec((tm, cout), lambda i: (i, 0)),
                pl.BlockSpec((m_tiles * _SUBLANE, cout), lambda i: (0, 0)),
                pl.BlockSpec((1, cout), lambda i: (0, 0)),
                pl.BlockSpec((1, cout), lambda i: (0, 0)),
            ],
            out_specs=pl.BlockSpec((tm, cout), lambda i: (i, 0)),
        ),
        compiler_params=pltpu.CompilerParams(
            dimension_semantics=("parallel",),
            vmem_limit_bytes=k2_vmem),
    )(conv_out, stats, gamma_row, beta_row)

    # un-pad + back to NCHW (single slice/transpose at the very end, f32 like the input)
    y = y[:m, :].reshape(n, oh, ow, cout)
    return jnp.transpose(y, (0, 3, 1, 2)).astype(x_nchw.dtype)


if __name__ == "__main__":
    # DCGAN-style DisConv block: in=4, out=8, kernel=4, stride=2, padding=1
    in_chans, out_chans, kernel_size, stride, padding = 4, 8, 4, 2, 1
    N, H, W = 2, 16, 16

    key = jax.random.PRNGKey(0)
    kx, kw_, kb = jax.random.split(key, 3)

    x = jax.random.normal(kx, (N, in_chans, H, W), dtype=jnp.float32)

    # Deterministic parameter init (shapes match nn.Conv2d / nn.BatchNorm2d).
    fan_in = in_chans * kernel_size * kernel_size
    bound = 1.0 / math.sqrt(fan_in)
    conv_w = jax.random.uniform(kw_, (out_chans, in_chans, kernel_size, kernel_size),
                                minval=-bound, maxval=bound, dtype=jnp.float32)
    conv_b = jax.random.uniform(kb, (out_chans,), minval=-bound, maxval=bound,
                                dtype=jnp.float32)
    bn_gamma = jnp.ones((out_chans,), dtype=jnp.float32)   # BatchNorm2d default weight
    bn_beta = jnp.zeros((out_chans,), dtype=jnp.float32)   # BatchNorm2d default bias

    out = dis_conv_forward(x, conv_w, conv_b, bn_gamma, bn_beta,
                           stride=stride, padding=padding)
    out = jax.block_until_ready(out)
    assert out.shape == (N, out_chans, H // 2, W // 2), out.shape

    # Pure-JAX f32 reference sanity check (loose tolerance: MXU inputs are bf16).
    ref = lax.conv_general_dilated(
        x, conv_w, (stride, stride), ((padding, padding), (padding, padding)),
        dimension_numbers=("NCHW", "OIHW", "NCHW")) + conv_b.reshape(1, -1, 1, 1)
    mu = ref.mean(axis=(0, 2, 3), keepdims=True)
    va = ref.var(axis=(0, 2, 3), keepdims=True)
    ref = (ref - mu) * lax.rsqrt(va + BN_EPS)
    ref = ref * bn_gamma.reshape(1, -1, 1, 1) + bn_beta.reshape(1, -1, 1, 1)
    ref = jnp.where(ref >= 0, ref, DIS_NEGSLOPE * ref)
    max_err = float(jnp.max(jnp.abs(out - ref)))
    assert max_err < 5e-2, f"max abs err vs reference: {max_err}"

    print("KERNEL_OK")
</pallas_src>

<mosaic_0001>
module attributes {stable_mosaic.version = 11 : i64} {
  func.func @_conv_stats_kernel(%arg0: i32, %arg1: i32, %arg2: memref<64x128xbf16, #tpu.memory_space<vmem>>, %arg3: memref<128x8xbf16, #tpu.memory_space<vmem>>, %arg4: memref<1x8xf32, #tpu.memory_space<vmem>>, %arg5: memref<64x8xbf16, #tpu.memory_space<vmem>>, %arg6: memref<8x8xf32, #tpu.memory_space<vmem>>, %arg7: memref<64x8xf32, #tpu.memory_space<vmem>>) attributes {dimension_semantics = [#tpu.dimension_semantics<parallel>, #tpu.dimension_semantics<arbitrary>], iteration_bounds = array<i64: 2, 1>, scalar_prefetch = 0 : i64, scratch_operands = 1 : i64, tpu.core_type = #tpu.core_type<tc>, window_params = [{transform_indices = @transform_0, window_bounds = array<i64: 64, 128>}, {pipeline_mode = #tpu.pipeline_mode<synchronous>, transform_indices = @transform_1, window_bounds = array<i64: 128, 8>}, {pipeline_mode = #tpu.pipeline_mode<synchronous>, transform_indices = @transform_2, window_bounds = array<i64: 1, 8>}, {transform_indices = @transform_3, window_bounds = array<i64: 64, 8>}, {transform_indices = @transform_4, window_bounds = array<i64: 8, 8>}]} {
    %c0_i32 = arith.constant 0 : i32
    %0 = arith.cmpi eq, %arg1, %c0_i32 : i32
    %1 = arith.extui %0 : i1 to i32
    %c0_i32_0 = arith.constant 0 : i32
    %2 = arith.cmpi ne, %1, %c0_i32_0 : i32
    scf.if %2 {
      %cst_10 = arith.constant 0.000000e+00 : f32
      %12 = vector.broadcast %cst_10 : f32 to vector<64x8xf32>
      %c0_11 = arith.constant 0 : index
      %c0_12 = arith.constant 0 : index
      %13 = vector.load %arg7[%c0_11, %c0_12] : memref<64x8xf32, #tpu.memory_space<vmem>>, vector<64x8xf32>
      tpu.vector_store %arg7[%c0_11, %c0_12], %12 {strides = array<i32>} : memref<64x8xf32, #tpu.memory_space<vmem>>, vector<64x8xf32>,
    } else {
    }
    %c0 = arith.constant 0 : index
    %c0_1 = arith.constant 0 : index
    %3 = vector.load %arg3[%c0, %c0_1] : memref<128x8xbf16, #tpu.memory_space<vmem>>, vector<128x8xbf16>
    %c0_2 = arith.constant 0 : index
    %c0_3 = arith.constant 0 : index
    %4 = vector.load %arg7[%c0_2, %c0_3] : memref<64x8xf32, #tpu.memory_space<vmem>>, vector<64x8xf32>
    %c0_4 = arith.constant 0 : index
    %c0_5 = arith.constant 0 : index
    %5 = vector.load %arg2[%c0_4, %c0_5] : memref<64x128xbf16, #tpu.memory_space<vmem>>, vector<64x128xbf16>
    %cst = arith.constant dense<0.000000e+00> : vector<64x8xf32>
    %6 = tpu.matmul %5, %3, %cst {dimension_numbers = #tpu.dot_dimension_numbers<[1], [0], [0], [1], [0, 0, 1, 1], [], []>} : vector<64x128xbf16>, vector<128x8xbf16>, vector<64x8xf32> -> vector<64x8xf32>
    %7 = arith.addf %4, %6 : vector<64x8xf32>
    %c0_6 = arith.constant 0 : index
    %c0_7 = arith.constant 0 : index
    %8 = vector.load %arg7[%c0_6, %c0_7] : memref<64x8xf32, #tpu.memory_space<vmem>>, vector<64x8xf32>
    tpu.vector_store %arg7[%c0_6, %c0_7], %7 {strides = array<i32>} : memref<64x8xf32, #tpu.memory_space<vmem>>, vector<64x8xf32>,
    %c0_i32_8 = arith.constant 0 : i32
    %9 = arith.cmpi eq, %arg1, %c0_i32_8 : i32
    %10 = arith.extui %9 : i1 to i32
    %c0_i32_9 = arith.constant 0 : i32
    %11 = arith.cmpi ne, %10, %c0_i32_9 : i32
    scf.if %11 {
      %c0_10 = arith.constant 0 : index
      %c0_11 = arith.constant 0 : index
      %12 = vector.load %arg7[%c0_10, %c0_11] : memref<64x8xf32, #tpu.memory_space<vmem>>, vector<64x8xf32>
      %c0_12 = arith.constant 0 : index
      %c0_13 = arith.constant 0 : index
      %13 = vector.load %arg4[%c0_12, %c0_13] : memref<1x8xf32, #tpu.memory_space<vmem>>, vector<1x8xf32>
      %14 = vector.broadcast %13 : vector<1x8xf32> to vector<64x8xf32>
      %15 = arith.addf %12, %14 : vector<64x8xf32>
      %16 = arith.truncf %15 : vector<64x8xf32> to vector<64x8xbf16>
      %c0_14 = arith.constant 0 : index
      %c0_15 = arith.constant 0 : index
      %17 = vector.load %arg5[%c0_14, %c0_15] : memref<64x8xbf16, #tpu.memory_space<vmem>>, vector<64x8xbf16>
      tpu.vector_store %arg5[%c0_14, %c0_15], %16 {strides = array<i32>} : memref<64x8xbf16, #tpu.memory_space<vmem>>, vector<64x8xbf16>,
      %c64_i32 = arith.constant 64 : i32
      %18 = arith.muli %arg0, %c64_i32 : i32
      %19 = tpu.iota {dimensions = array<i32: 0>} : vector<64x1xi32>
      %20 = vector.broadcast %18 : i32 to vector<64x1xi32>
      %21 = arith.addi %20, %19 : vector<64x1xi32>
      %c128_i32 = arith.constant 128 : i32
      %22 = vector.broadcast %c128_i32 : i32 to vector<64x1xi32>
      %23 = arith.cmpi slt, %21, %22 : vector<64x1xi32>
      %24 = arith.extui %23 : vector<64x1xi1> to vector<64x1xi32>
      %25 = arith.sitofp %24 : vector<64x1xi32> to vector<64x1xf32>
      %26 = vector.broadcast %25 : vector<64x1xf32> to vector<64x8xf32>
      %27 = arith.mulf %15, %26 : vector<64x8xf32>
      %cst_16 = arith.constant dense<0.000000e+00> : vector<8xf32>
      %28 = vector.multi_reduction <add>, %27, %cst_16 [0] : vector<64x8xf32> to vector<8xf32>
      %29 = vector.shape_cast %28 : vector<8xf32> to vector<1x8xf32>
      %30 = arith.mulf %27, %27 : vector<64x8xf32>
      %cst_17 = arith.constant dense<0.000000e+00> : vector<8xf32>
      %31 = vector.multi_reduction <add>, %30, %cst_17 [0] : vector<64x8xf32> to vector<8xf32>
      %32 = vector.shape_cast %31 : vector<8xf32> to vector<1x8xf32>
      %33 = tpu.iota {dimensions = array<i32: 0>} : vector<8x1xi32>
      %c0_i32_18 = arith.constant 0 : i32
      %34 = vector.broadcast %c0_i32_18 : i32 to vector<8x1xi32>
      %35 = arith.cmpi eq, %33, %34 : vector<8x1xi32>
      %c1_i32 = arith.constant 1 : i32
      %36 = vector.broadcast %c1_i32 : i32 to vector<8x1xi32>
      %37 = arith.cmpi eq, %33, %36 : vector<8x1xi32>
      %cst_19 = arith.constant 0.000000e+00 : f32
      %38 = vector.shape_cast %37 : vector<8x1xi1> to vector<8x1xi1>
      %39 = vector.broadcast %38 : vector<8x1xi1> to vector<8x8xi1>
      %40 = vector.shape_cast %32 : vector<1x8xf32> to vector<1x8xf32>
      %41 = vector.broadcast %40 : vector<1x8xf32> to vector<8x8xf32>
      %42 = vector.broadcast %cst_19 : f32 to vector<8x8xf32>
      %43 = arith.select %39, %41, %42 : vector<8x8xi1>, vector<8x8xf32>
      %44 = vector.shape_cast %35 : vector<8x1xi1> to vector<8x1xi1>
      %45 = vector.broadcast %44 : vector<8x1xi1> to vector<8x8xi1>
      %46 = vector.shape_cast %29 : vector<1x8xf32> to vector<1x8xf32>
      %47 = vector.broadcast %46 : vector<1x8xf32> to vector<8x8xf32>
      %48 = arith.select %45, %47, %43 : vector<8x8xi1>, vector<8x8xf32>
      %c0_20 = arith.constant 0 : index
      %c0_21 = arith.constant 0 : index
      %49 = vector.load %arg6[%c0_20, %c0_21] : memref<8x8xf32, #tpu.memory_space<vmem>>, vector<8x8xf32>
      tpu.vector_store %arg6[%c0_20, %c0_21], %48 {strides = array<i32>} : memref<8x8xf32, #tpu.memory_space<vmem>>, vector<8x8xf32>,
    } else {
    }
    return
  }
  func.func @transform_0(%arg0: i32, %arg1: i32) -> (i32, i32) {
    %c0_i32 = arith.constant 0 : i32
    return %arg0, %arg1 : i32, i32
  }
  func.func @transform_1(%arg0: i32, %arg1: i32) -> (i32, i32) {
    %c0_i32 = arith.constant 0 : i32
    %c0_i32_0 = arith.constant 0 : i32
    %c0_i32_1 = arith.constant 0 : i32
    return %c0_i32, %c0_i32_0 : i32, i32
  }
  func.func @transform_2(%arg0: i32, %arg1: i32) -> (i32, i32) {
    %c0_i32 = arith.constant 0 : i32
    %c0_i32_0 = arith.constant 0 : i32
    %c0_i32_1 = arith.constant 0 : i32
    return %c0_i32, %c0_i32_0 : i32, i32
  }
  func.func @transform_3(%arg0: i32, %arg1: i32) -> (i32, i32) {
    %c0_i32 = arith.constant 0 : i32
    %c0_i32_0 = arith.constant 0 : i32
    return %arg0, %c0_i32 : i32, i32
  }
  func.func @transform_4(%arg0: i32, %arg1: i32) -> (i32, i32) {
    %c0_i32 = arith.constant 0 : i32
    %c0_i32_0 = arith.constant 0 : i32
    return %arg0, %c0_i32 : i32, i32
  }
}

module attributes {stable_mosaic.version = 11 : i64} {
  func.func @_bn_lrelu_kernel(%arg0: i32, %arg1: memref<64x8xbf16, #tpu.memory_space<vmem>>, %arg2: memref<16x8xf32, #tpu.memory_space<vmem>>, %arg3: memref<1x8xf32, #tpu.memory_space<vmem>>, %arg4: memref<1x8xf32, #tpu.memory_space<vmem>>, %arg5: memref<64x8xf32, #tpu.memory_space<vmem>>) attributes {dimension_semantics = [#tpu.dimension_semantics<parallel>], iteration_bounds = array<i64: 2>, scalar_prefetch = 0 : i64, scratch_operands = 0 : i64, tpu.core_type = #tpu.core_type<tc>, window_params = [{transform_indices = @transform_0, window_bounds = array<i64: 64, 8>}, {pipeline_mode = #tpu.pipeline_mode<synchronous>, transform_indices = @transform_1, window_bounds = array<i64: 16, 8>}, {pipeline_mode = #tpu.pipeline_mode<synchronous>, transform_indices = @transform_2, window_bounds = array<i64: 1, 8>}, {pipeline_mode = #tpu.pipeline_mode<synchronous>, transform_indices = @transform_3, window_bounds = array<i64: 1, 8>}, {transform_indices = @transform_4, window_bounds = array<i64: 64, 8>}]} {
    %c0 = arith.constant 0 : index
    %c0_0 = arith.constant 0 : index
    %0 = vector.load %arg2[%c0, %c0_0] : memref<16x8xf32, #tpu.memory_space<vmem>>, vector<16x8xf32>
    %1 = tpu.iota {dimensions = array<i32: 0>} : vector<16x1xi32>
    %c7_i32 = arith.constant 7 : i32
    %2 = vector.broadcast %c7_i32 : i32 to vector<16x1xi32>
    %3 = arith.andi %1, %2 : vector<16x1xi32>
    %c0_i32 = arith.constant 0 : i32
    %4 = vector.broadcast %c0_i32 : i32 to vector<16x1xi32>
    %5 = arith.cmpi eq, %3, %4 : vector<16x1xi32>
    %cst = arith.constant 0.000000e+00 : f32
    %6 = vector.shape_cast %5 : vector<16x1xi1> to vector<16x1xi1>
    %7 = vector.broadcast %6 : vector<16x1xi1> to vector<16x8xi1>
    %8 = vector.broadcast %cst : f32 to vector<16x8xf32>
    %9 = arith.select %7, %0, %8 : vector<16x8xi1>, vector<16x8xf32>
    %cst_1 = arith.constant dense<0.000000e+00> : vector<8xf32>
    %10 = vector.multi_reduction <add>, %9, %cst_1 [0] : vector<16x8xf32> to vector<8xf32>
    %11 = vector.shape_cast %10 : vector<8xf32> to vector<1x8xf32>
    %c1_i32 = arith.constant 1 : i32
    %12 = vector.broadcast %c1_i32 : i32 to vector<16x1xi32>
    %13 = arith.cmpi eq, %3, %12 : vector<16x1xi32>
    %cst_2 = arith.constant 0.000000e+00 : f32
    %14 = vector.shape_cast %13 : vector<16x1xi1> to vector<16x1xi1>
    %15 = vector.broadcast %14 : vector<16x1xi1> to vector<16x8xi1>
    %16 = vector.broadcast %cst_2 : f32 to vector<16x8xf32>
    %17 = arith.select %15, %0, %16 : vector<16x8xi1>, vector<16x8xf32>
    %cst_3 = arith.constant dense<0.000000e+00> : vector<8xf32>
    %18 = vector.multi_reduction <add>, %17, %cst_3 [0] : vector<16x8xf32> to vector<8xf32>
    %19 = vector.shape_cast %18 : vector<8xf32> to vector<1x8xf32>
    %cst_4 = arith.constant 7.812500e-03 : f32
    %20 = vector.broadcast %cst_4 : f32 to vector<1x8xf32>
    %21 = arith.mulf %11, %20 : vector<1x8xf32>
    %cst_5 = arith.constant 7.812500e-03 : f32
    %22 = vector.broadcast %cst_5 : f32 to vector<1x8xf32>
    %23 = arith.mulf %19, %22 : vector<1x8xf32>
    %24 = arith.mulf %21, %21 : vector<1x8xf32>
    %25 = arith.subf %23, %24 : vector<1x8xf32>
    %cst_6 = arith.constant 0.000000e+00 : f32
    %26 = vector.broadcast %cst_6 : f32 to vector<1x8xf32>
    %27 = arith.maximumf %25, %26 : vector<1x8xf32>
    %cst_7 = arith.constant 9.99999974E-6 : f32
    %28 = vector.broadcast %cst_7 : f32 to vector<1x8xf32>
    %29 = arith.addf %27, %28 : vector<1x8xf32>
    %30 = math.rsqrt %29 : vector<1x8xf32>
    %c0_8 = arith.constant 0 : index
    %c0_9 = arith.constant 0 : index
    %31 = vector.load %arg3[%c0_8, %c0_9] : memref<1x8xf32, #tpu.memory_space<vmem>>, vector<1x8xf32>
    %32 = arith.mulf %31, %30 : vector<1x8xf32>
    %c0_10 = arith.constant 0 : index
    %c0_11 = arith.constant 0 : index
    %33 = vector.load %arg4[%c0_10, %c0_11] : memref<1x8xf32, #tpu.memory_space<vmem>>, vector<1x8xf32>
    %34 = arith.mulf %21, %32 : vector<1x8xf32>
    %35 = arith.subf %33, %34 : vector<1x8xf32>
    %c0_12 = arith.constant 0 : index
    %c0_13 = arith.constant 0 : index
    %36 = vector.load %arg1[%c0_12, %c0_13] : memref<64x8xbf16, #tpu.memory_space<vmem>>, vector<64x8xbf16>
    %37 = arith.extf %36 : vector<64x8xbf16> to vector<64x8xf32>
    %38 = vector.broadcast %32 : vector<1x8xf32> to vector<64x8xf32>
    %39 = arith.mulf %37, %38 : vector<64x8xf32>
    %40 = vector.broadcast %35 : vector<1x8xf32> to vector<64x8xf32>
    %41 = arith.addf %39, %40 : vector<64x8xf32>
    %cst_14 = arith.constant 0.000000e+00 : f32
    %42 = vector.broadcast %cst_14 : f32 to vector<64x8xf32>
    %43 = arith.cmpf oge, %41, %42 : vector<64x8xf32>
    %cst_15 = arith.constant 2.000000e-01 : f32
    %44 = vector.broadcast %cst_15 : f32 to vector<64x8xf32>
    %45 = arith.mulf %44, %41 : vector<64x8xf32>
    %46 = arith.select %43, %41, %45 : vector<64x8xi1>, vector<64x8xf32>
    %c0_16 = arith.constant 0 : index
    %c0_17 = arith.constant 0 : index
    %47 = vector.load %arg5[%c0_16, %c0_17] : memref<64x8xf32, #tpu.memory_space<vmem>>, vector<64x8xf32>
    tpu.vector_store %arg5[%c0_16, %c0_17], %46 {strides = array<i32>} : memref<64x8xf32, #tpu.memory_space<vmem>>, vector<64x8xf32>,
    return
  }
  func.func @transform_0(%arg0: i32) -> (i32, i32) {
    %c0_i32 = arith.constant 0 : i32
    %c0_i32_0 = arith.constant 0 : i32
    return %arg0, %c0_i32 : i32, i32
  }
  func.func @transform_1(%arg0: i32) -> (i32, i32) {
    %c0_i32 = arith.constant 0 : i32
    %c0_i32_0 = arith.constant 0 : i32
    %c0_i32_1 = arith.constant 0 : i32
    return %c0_i32, %c0_i32_0 : i32, i32
  }
  func.func @transform_2(%arg0: i32) -> (i32, i32) {
    %c0_i32 = arith.constant 0 : i32
    %c0_i32_0 = arith.constant 0 : i32
    %c0_i32_1 = arith.constant 0 : i32
    return %c0_i32, %c0_i32_0 : i32, i32
  }
  func.func @transform_3(%arg0: i32) -> (i32, i32) {
    %c0_i32 = arith.constant 0 : i32
    %c0_i32_0 = arith.constant 0 : i32
    %c0_i32_1 = arith.constant 0 : i32
    return %c0_i32, %c0_i32_0 : i32, i32
  }
  func.func @transform_4(%arg0: i32) -> (i32, i32) {
    %c0_i32 = arith.constant 0 : i32
    %c0_i32_0 = arith.constant 0 : i32
    return %arg0, %c0_i32 : i32, i32
  }
}

</mosaic_0001>

<llo_original>
// kernel: dis_conv_forward.3
$region0: #{dis_conv_forward.3}
  #allocation0 [shape = 'u32[]', space=smem, size = 0x4, offset = 0x4, fixed_abs, tag = 'smem constant byte address 0x4 - core index']
  #allocation1 [shape = 'u32[144,128]{1,0:T(1,128)}', space=vmem, size = 0x12000, scoped, tag = 'internal scratch']
  %s0 = inlined_call_operand.vmem [shape: bf16[128,8], index: 0, kind: input, shape index: {}]
  %s1 = inlined_call_operand.vmem [shape: f32[16,8], index: 1, kind: input, shape index: {}]
  %s2 = inlined_call_operand.vmem [shape: f32[1,8], index: 2, kind: input, shape index: {}]
  %s3 = inlined_call_operand.vmem [shape: f32[1,8], index: 3, kind: input, shape index: {}]
  %s4 = inlined_call_operand.vmem [shape: f32[128,8], index: 4, kind: output, shape index: {}]
  %s5 = sld [smem:[#allocation0]]
  $region49: #{dis_conv_forward.3} parent=0
    _
  %s7 = ssub.s32 1, %s5
  %s8 = scalar_select 0, %s7, %s5
  loop: start=0, step=1, limit=4
  $region2: #{dis_conv_forward.3} parent=0 // loop_pre_header
    _
  $region3: #{dis_conv_forward.3} parent=0 // loop_header
    %s10 = sphi 0, %s14
    %p11 = scmp.ge.s32.totalorder %s10, 4
    %s20 = sphi 0, %s22
    %s23 = sphi 0, %s20
    %s24 = sphi 0, %s23
    %s40 = sphi 0, %s24
    %s44 = sphi 0, %s44
    %s46 = sphi 0, %s44
    %s47 = sphi 0, %s46
    %s61 = sphi 0, %s47
    %s65 = sphi 0, %s65
    %s67 = sphi 0, %s65
    %s68 = sphi 0, %s67
    %s82 = sphi 0, %s68
    %s86 = sphi 0, %s86
    %s88 = sphi 0, %s86
    %s89 = sphi 0, %s88
    %s103 = sphi 0, %s89
    %s109 = sphi 0, %s111
    %s112 = sphi 0, %s109
    %s113 = sphi 0, %s112
    %s129 = sphi 0, %s113
  $region4: #{dis_conv_forward.3} parent=0 // loop_header_branch
    %13 = sbr.rel (%p11) target = $region8
  $region5: #{dis_conv_forward.3} parent=0 // loop_body
    %s15 = ssub.s32 %s10, 1
    %s16 = ssub.s32 %s10, 2
    %s17 = sadd.s32 %s10, 1
    %s18 = ssub.s32 %s10, %s17
    %p19 = scmp.eq.s32.totalorder %s18, 0
    %s21 = sadd.s32 %s20, 1
    %s22 = scalar_select %p19, %s20, %s21
    %p25 = pneg %p19
    %p26 = scmp.eq.s32.totalorder %s10, 1
    %p27 = por %p25, %p26
    %p28 = scmp.ne.s32.totalorder %s20, %s23
    %p29 = scmp.eq.s32.totalorder %s10, 0
    %p30 = por %p28, %p29
    %p31 = scmp.ne.s32.totalorder %s20, %s23
    %p32 = scmp.eq.s32.totalorder %s15, 1
    %p33 = por %p31, %p32
    %p34 = scmp.ne.s32.totalorder %s23, %s24
    %p35 = scmp.eq.s32.totalorder %s15, 0
    %p36 = por %p34, %p35
    %p37 = scmp.ne.s32.totalorder %s23, %s24
    %p38 = scmp.eq.s32.totalorder %s16, 1
    %p39 = por %p37, %p38
    %p41 = scmp.ne.s32.totalorder %s24, %s40
    %p42 = scmp.eq.s32.totalorder %s16, 0
    %p43 = por %p41, %p42
    %s45 = sadd.s32 %s44, 1
    %p48 = scmp.eq.s32.totalorder %s10, 1
    %p49 = scmp.ne.s32.totalorder %s44, %s46
    %p50 = scmp.eq.s32.totalorder %s10, 0
    %p51 = por %p49, %p50
    %p52 = scmp.ne.s32.totalorder %s44, %s46
    %p53 = scmp.eq.s32.totalorder %s15, 1
    %p54 = por %p52, %p53
    %p55 = scmp.ne.s32.totalorder %s46, %s47
    %p56 = scmp.eq.s32.totalorder %s15, 0
    %p57 = por %p55, %p56
    %p58 = scmp.ne.s32.totalorder %s46, %s47
    %p59 = scmp.eq.s32.totalorder %s16, 1
    %p60 = por %p58, %p59
    %p62 = scmp.ne.s32.totalorder %s47, %s61
    %p63 = scmp.eq.s32.totalorder %s16, 0
    %p64 = por %p62, %p63
    %s66 = sadd.s32 %s65, 1
    %p69 = scmp.eq.s32.totalorder %s10, 1
    %p70 = scmp.ne.s32.totalorder %s65, %s67
    %p71 = scmp.eq.s32.totalorder %s10, 0
    %p72 = por %p70, %p71
    %p73 = scmp.ne.s32.totalorder %s65, %s67
    %p74 = scmp.eq.s32.totalorder %s15, 1
    %p75 = por %p73, %p74
    %p76 = scmp.ne.s32.totalorder %s67, %s68
    %p77 = scmp.eq.s32.totalorder %s15, 0
    %p78 = por %p76, %p77
    %p79 = scmp.ne.s32.totalorder %s67, %s68
    %p80 = scmp.eq.s32.totalorder %s16, 1
    %p81 = por %p79, %p80
    %p83 = scmp.ne.s32.totalorder %s68, %s82
    %p84 = scmp.eq.s32.totalorder %s16, 0
    %p85 = por %p83, %p84
    %s87 = sadd.s32 %s86, 1
    %p90 = scmp.eq.s32.totalorder %s10, 1
    %p91 = scmp.ne.s32.totalorder %s86, %s88
    %p92 = scmp.eq.s32.totalorder %s10, 0
    %p93 = por %p91, %p92
    %p94 = scmp.ne.s32.totalorder %s86, %s88
    %p95 = scmp.eq.s32.totalorder %s15, 1
    %p96 = por %p94, %p95
    %p97 = scmp.ne.s32.totalorder %s88, %s89
    %p98 = scmp.eq.s32.totalorder %s15, 0
    %p99 = por %p97, %p98
    %p100 = scmp.ne.s32.totalorder %s88, %s89
    %p101 = scmp.eq.s32.totalorder %s16, 1
    %p102 = por %p100, %p101
    %p104 = scmp.ne.s32.totalorder %s89, %s103
    %p105 = scmp.eq.s32.totalorder %s16, 0
    %p106 = por %p104, %p105
    %s107 = ssub.s32 %s10, %s17
    %p108 = scmp.eq.s32.totalorder %s107, 0
    %s110 = sadd.s32 %s109, 1
    %s111 = scalar_select %p108, %s109, %s110
    %p114 = pneg %p108
    %p115 = scmp.eq.s32.totalorder %s10, 1
    %p116 = por %p114, %p115
    %p117 = scmp.ne.s32.totalorder %s109, %s112
    %p118 = scmp.eq.s32.totalorder %s10, 0
    %p119 = por %p117, %p118
    %p120 = scmp.ne.s32.totalorder %s109, %s112
    %p121 = scmp.eq.s32.totalorder %s15, 1
    %p122 = por %p120, %p121
    %p123 = scmp.ne.s32.totalorder %s112, %s113
    %p124 = scmp.eq.s32.totalorder %s15, 0
    %p125 = por %p123, %p124
    %p126 = scmp.ne.s32.totalorder %s112, %s113
    %p127 = scmp.eq.s32.totalorder %s16, 1
    %p128 = por %p126, %p127
    %p130 = scmp.ne.s32.totalorder %s113, %s129
    %p131 = scmp.eq.s32.totalorder %s16, 0
    %p132 = por %p130, %p131
    %p133 = scmp.le.s32.totalorder 1, %s10
    %p134 = scmp.lt.s32.totalorder %s10, 3
    %p135 = pnand %p133, %p134
    %p136 = pneg %p135
    // Predicated region
    $region9: #{dis_conv_forward.3} parent=5 // pred_check
      _
    $region10: #{dis_conv_forward.3} parent=5 // pred_check_branch
      %138 = sbr.rel (%p135) target = $region12
    $region11: #{dis_conv_forward.3} parent=5 // pred_region
      %s139 = ssub.s32 %s10, 1
      // Predicated region
      $region13: #{dis_conv_forward.3} parent=11 // pred_check
        %p140 = pneg %p57
      $region14: #{dis_conv_forward.3} parent=11 // pred_check_branch
        %142 = sbr.rel (%p140) target = $region16
      $region15: #{dis_conv_forward.3} parent=11 // pred_region
        _
      $region16: #{dis_conv_forward.3} parent=11 // pred_fallthru
        _
      // Predicated region
      $region17: #{dis_conv_forward.3} parent=11 // pred_check
        %p143 = pneg %p78
      $region18: #{dis_conv_forward.3} parent=11 // pred_check_branch
        %145 = sbr.rel (%p143) target = $region20
      $region19: #{dis_conv_forward.3} parent=11 // pred_region
        _
      $region20: #{dis_conv_forward.3} parent=11 // pred_fallthru
        _
      // Predicated region
      $region21: #{dis_conv_forward.3} parent=11 // pred_check
        %p146 = pneg %p99
      $region22: #{dis_conv_forward.3} parent=11 // pred_check_branch
        %148 = sbr.rel (%p146) target = $region24
      $region23: #{dis_conv_forward.3} parent=11 // pred_region
        _
      $region24: #{dis_conv_forward.3} parent=11 // pred_fallthru
        _
    $region12: #{dis_conv_forward.3} parent=5 // pred_fallthru
      _
    %p149 = scmp.lt.s32.totalorder %s10, 2
    // Predicated region
    $region25: #{dis_conv_forward.3} parent=5 // pred_check
      %p150 = pneg %p149
    $region26: #{dis_conv_forward.3} parent=5 // pred_check_branch
      %152 = sbr.rel (%p150) target = $region28
    $region27: #{dis_conv_forward.3} parent=5 // pred_region
      // Predicated region
      $region29: #{dis_conv_forward.3} parent=27 // pred_check
        %p153 = pneg %p30
      $region30: #{dis_conv_forward.3} parent=27 // pred_check_branch
        %155 = sbr.rel (%p153) target = $region32
      $region31: #{dis_conv_forward.3} parent=27 // pred_region
        %s156 = smul.u32 8, %s10
        %p157 = scmp.lt.s32.totalorder %s156, 15
        %s158 = scalar_select %p157, %s156, 15
        %s159 = smul.addr %s158, 4
        %s160 = scalar_lea.vmem %s0, %s159
        %s161 = smul.u32 8, %s10
      $region32: #{dis_conv_forward.3} parent=27 // pred_fallthru
        _
    $region28: #{dis_conv_forward.3} parent=5 // pred_fallthru
      _
    %p162 = scmp.le.s32.totalorder 1, %s10
    %p163 = scmp.lt.s32.totalorder %s10, 3
    %p164 = pnand %p162, %p163
    %p165 = pneg %p164
    // Predicated region
    $region33: #{dis_conv_forward.3} parent=5 // pred_check
      _
    $region34: #{dis_conv_forward.3} parent=5 // pred_check_branch
      %167 = sbr.rel (%p164) target = $region36
    $region35: #{dis_conv_forward.3} parent=5 // pred_region
      %s168 = ssub.s32 %s10, 1
      %s169 = smul.u32 8, %s15
      %p170 = scmp.lt.s32.totalorder %s169, 15
      %s171 = scalar_select %p170, %s169, 15
      %s172 = smul.addr %s171, 4
      %s173 = scalar_lea.vmem %s0, %s172
      %p174 = pneg %p36
      %p175 = pneg %p33
      %p176 = pneg %p57
      %p177 = pneg %p54
      %p178 = pneg %p78
      %p179 = pneg %p75
      %p180 = pneg %p99
      %p181 = pneg %p96
      %p182 = pneg %p125
      %p183 = pneg %p122
      %s184 = smul.u32 8, %s15
      %p185 = scmp.lt.s32.totalorder %s184, 15
      %s186 = scalar_select %p185, %s184, 15
      %s187 = smul.addr %s186, 8
      %s188 = scalar_lea.vmem %s4, %s187
      %s189 = smul.u32 8, %s15
      %p190 = scmp.lt.s32.totalorder %s189, 15
      %s191 = scalar_select %p190, %s189, 15
      %s192 = smul.addr %s191, 4
      %s193 = scalar_lea.vmem %s0, %s192
      %s194 = smul.u32 8, %s15
      %s195 = smul.u32 8, %s15
      %p196 = scmp.lt.s32.totalorder %s195, 15
      %s197 = scalar_select %p196, %s195, 15
      %s198 = smul.addr %s197, 8
      %s199 = scalar_lea.vmem %s4, %s198
      %s200 = smul.u32 8, %s15
      %v201 = vld [vmem:[%s1] sm:$0xff]
      %v202 = vld [vmem:[%s1 + $0x8] sm:$0xff]
      %v203 = vlaneseq
      %v204 = vshrl.u32 %v203, 7
      %v205 = vadd.s32 %v204, 8
      %v206 = vand.u32 %v204, 7
      %v207 = vand.u32 %v205, 7
      %vm208 = vcmp.eq.s32.totalorder %v206, 0
      %vm209 = vcmp.eq.s32.totalorder %v207, 0
      %v210 = vsel %vm208, 1, 0
      %v211 = vsel %vm209, 1, 0
      %vm212 = vcmp.eq.s32.totalorder %v210, 1
      %vm213 = vcmp.eq.s32.totalorder %v211, 1
      %v214 = vsel %vm212, %v201, 0.0
      %v215 = vsel %vm213, %v202, 0.0
      %vm216 = vcmask 64512
      %v217 = vsel %vm216, %v214, 0.0
      %v218 = vsel %vm216, %v215, 0.0
      %v219 = vadd.f32 %v217, %v218
      %v220 = vrot.slane %v219, 4
      %v221 = vadd.f32 %v219, %v220
      %v222 = vrot.slane %v221, 2
      %v223 = vadd.f32 %v221, %v222
      %v224 = vrot.slane %v223, 1
      %v225 = vadd.f32 %v223, %v224
      %vm226 = vcmp.eq.s32.totalorder %v206, 1
      %vm227 = vcmp.eq.s32.totalorder %v207, 1
      %v228 = vsel %vm226, 1, 0
      %v229 = vsel %vm227, 1, 0
      %vm230 = vcmp.eq.s32.totalorder %v228, 1
      %vm231 = vcmp.eq.s32.totalorder %v229, 1
      %v232 = vsel %vm230, %v201, 0.0
      %v233 = vsel %vm231, %v202, 0.0
      %v234 = vsel %vm216, %v232, 0.0
      %v235 = vsel %vm216, %v233, 0.0
      %v236 = vadd.f32 %v234, %v235
      %v237 = vrot.slane %v236, 4
      %v238 = vadd.f32 %v236, %v237
      %v239 = vrot.slane %v238, 2
      %v240 = vadd.f32 %v238, %v239
      %v241 = vrot.slane %v240, 1
      %v242 = vadd.f32 %v240, %v241
      %v243 = vmul.f32 %v225, 0.0078125
      %v244 = vmul.f32 %v242, 0.0078125
      %v245 = vmul.f32 %v243, %v243
      %v246 = vsub.f32 %v244, %v245
      %v247 = vmax.f32 %v246, 0.0
      %v248 = vadd.f32 %v247, 1e-05
      %v249 = vrsqrt.pop %v248
      %v250 = vld [vmem:[%s2] sm:$0x1]
      %v251 = vmul.f32 %v250, %v249
      %v252 = vld [vmem:[%s3] sm:$0x1]
      %v253 = vmul.f32 %v243, %v251
      %v254 = vsub.f32 %v252, %v253
      %v255 = vld [vmem:[%s193] sm:$0xf]
      %v256 = vld [vmem:[%s193 + $0x4] sm:$0xf]
      %v257 = vld [vmem:[%s193 + $0x8] sm:$0xf]
      %v258 = vld [vmem:[%s193 + $0xc] sm:$0xf]
      %v259 = vld [vmem:[%s193 + $0x10] sm:$0xf]
      %v260 = vld [vmem:[%s193 + $0x14] sm:$0xf]
      %v261 = vld [vmem:[%s193 + $0x18] sm:$0xf]
      %v262 = vld [vmem:[%s193 + $0x1c] sm:$0xf]
      %v263 = vunpack.c.l.bf16 %v255
      %v264 = vunpack.c.l.bf16 %v256
      %v265 = vunpack.c.l.bf16 %v257
      %v266 = vunpack.c.l.bf16 %v258
      %v267 = vunpack.c.l.bf16 %v259
      %v268 = vunpack.c.l.bf16 %v260
      %v269 = vunpack.c.l.bf16 %v261
      %v270 = vunpack.c.l.bf16 %v262
      %v272 = vlaneseq
      %v273 = vshrl.u32 %v272, 7
      %v274 = vsub.s32 0, %v273
      %v275 = vrot.slane %v251, %v274
      %v277 = vmul.f32 %v263, %v275
      %v278 = vmul.f32 %v264, %v275
      %v279 = vmul.f32 %v265, %v275
      %v280 = vmul.f32 %v266, %v275
      %v281 = vmul.f32 %v267, %v275
      %v282 = vmul.f32 %v268, %v275
      %v283 = vmul.f32 %v269, %v275
      %v284 = vmul.f32 %v270, %v275
      %v286 = vlaneseq
      %v287 = vshrl.u32 %v286, 7
      %v288 = vsub.s32 0, %v287
      %v289 = vrot.slane %v254, %v288
      %v291 = vadd.f32 %v277, %v289
      %v292 = vadd.f32 %v278, %v289
      %v293 = vadd.f32 %v279, %v289
      %v294 = vadd.f32 %v280, %v289
      %v295 = vadd.f32 %v281, %v289
      %v296 = vadd.f32 %v282, %v289
      %v297 = vadd.f32 %v283, %v289
      %v298 = vadd.f32 %v284, %v289
      %vm299 = vcmp.ge.f32.partialorder %v291, 0.0
      %vm300 = vcmp.ge.f32.partialorder %v292, 0.0
      %vm301 = vcmp.ge.f32.partialorder %v293, 0.0
      %vm302 = vcmp.ge.f32.partialorder %v294, 0.0
      %vm303 = vcmp.ge.f32.partialorder %v295, 0.0
      %vm304 = vcmp.ge.f32.partialorder %v296, 0.0
      %vm305 = vcmp.ge.f32.partialorder %v297, 0.0
      %vm306 = vcmp.ge.f32.partialorder %v298, 0.0
      %v307 = vmul.f32 %v291, 0.2
      %v308 = vmul.f32 %v292, 0.2
      %v309 = vmul.f32 %v293, 0.2
      %v310 = vmul.f32 %v294, 0.2
      %v311 = vmul.f32 %v295, 0.2
      %v312 = vmul.f32 %v296, 0.2
      %v313 = vmul.f32 %v297, 0.2
      %v314 = vmul.f32 %v298, 0.2
      %v315 = vsel %vm299, %v291, %v307
      %v316 = vsel %vm300, %v292, %v308
      %v317 = vsel %vm301, %v293, %v309
      %v318 = vsel %vm302, %v294, %v310
      %v319 = vsel %vm303, %v295, %v311
      %v320 = vsel %vm304, %v296, %v312
      %v321 = vsel %vm305, %v297, %v313
      %v322 = vsel %vm306, %v298, %v314
      %323 = vst.msk [vmem:[%s199] sm:$0xff] %vm216, %v315
      %324 = vst.msk [vmem:[%s199 + $0x8] sm:$0xff] %vm216, %v316
      %325 = vst.msk [vmem:[%s199 + $0x10] sm:$0xff] %vm216, %v317
      %326 = vst.msk [vmem:[%s199 + $0x18] sm:$0xff] %vm216, %v318
      %327 = vst.msk [vmem:[%s199 + $0x20] sm:$0xff] %vm216, %v319
      %328 = vst.msk [vmem:[%s199 + $0x28] sm:$0xff] %vm216, %v320
      %329 = vst.msk [vmem:[%s199 + $0x30] sm:$0xff] %vm216, %v321
      %330 = vst.msk [vmem:[%s199 + $0x38] sm:$0xff] %vm216, %v322
      %s331 = smul.u32 8, %s15
      %p332 = scmp.lt.s32.totalorder %s331, 15
      %s333 = scalar_select %p332, %s331, 15
      %s334 = smul.addr %s333, 8
      %s335 = scalar_lea.vmem %s4, %s334
      // Predicated region
      $region37: #{dis_conv_forward.3} parent=35 // pred_check
        %p336 = pneg %p122
      $region38: #{dis_conv_forward.3} parent=35 // pred_check_branch
        %338 = sbr.rel (%p336) target = $region40
      $region39: #{dis_conv_forward.3} parent=35 // pred_region
        %s339 = smul.u32 8, %s15
      $region40: #{dis_conv_forward.3} parent=35 // pred_fallthru
        _
    $region36: #{dis_conv_forward.3} parent=5 // pred_fallthru
      _
    %p340 = scmp.le.s32.totalorder 2, %s10
    // Predicated region
    $region41: #{dis_conv_forward.3} parent=5 // pred_check
      %p341 = pneg %p340
    $region42: #{dis_conv_forward.3} parent=5 // pred_check_branch
      %343 = sbr.rel (%p341) target = $region44
    $region43: #{dis_conv_forward.3} parent=5 // pred_region
      %s344 = ssub.s32 %s10, 2
      // Predicated region
      $region45: #{dis_conv_forward.3} parent=43 // pred_check
        %p345 = pneg %p128
      $region46: #{dis_conv_forward.3} parent=43 // pred_check_branch
        %347 = sbr.rel (%p345) target = $region48
      $region47: #{dis_conv_forward.3} parent=43 // pred_region
        %s348 = smul.u32 8, %s16
        %p349 = scmp.lt.s32.totalorder %s348, 15
        %s350 = scalar_select %p349, %s348, 15
        %s351 = smul.addr %s350, 8
        %s352 = scalar_lea.vmem %s4, %s351
      $region48: #{dis_conv_forward.3} parent=43 // pred_fallthru
        _
    $region44: #{dis_conv_forward.3} parent=5 // pred_fallthru
      _
  $region6: #{dis_conv_forward.3} parent=0 // loop_footer
    %s14 = sadd.s32 1, %s10
  $region7: #{dis_conv_forward.3} parent=0 // loop_footer_branch
    %9 = sbr.rel target = $region3
  $region8: #{dis_conv_forward.3} parent=0 // loop_exit
    _

// kernel: dis_conv_forward.2
$region0: #{dis_conv_forward.2}
  #allocation0 [shape = 'u32[]', space=smem, size = 0x4, offset = 0x4, fixed_abs, tag = 'smem constant byte address 0x4 - core index']
  #allocation1 [shape = 'u32[144,128]{1,0:T(1,128)}', space=vmem, size = 0x12000, scoped, tag = 'internal scratch']
  #allocation2 [shape = 'f32[64,8]{1,0:T(8,128)}', space=vmem, size = 0x8000, scoped, tag = 'scratch operand']
  %s0 = inlined_call_operand.vmem [shape: bf16[128,128], index: 0, kind: input, shape index: {}]
  %s1 = inlined_call_operand.vmem [shape: bf16[128,8], index: 1, kind: input, shape index: {}]
  %s2 = inlined_call_operand.vmem [shape: f32[1,8], index: 2, kind: input, shape index: {}]
  %s3 = inlined_call_operand.vmem [shape: bf16[128,8], index: 3, kind: output, shape index: {0}]
  %s4 = inlined_call_operand.vmem [shape: f32[16,8], index: 4, kind: output, shape index: {1}]
  %5 = xla_tuple %s3, %s4
  %s6 = sld [smem:[#allocation0]]
  $region61: #{dis_conv_forward.2} parent=0
    _
  %s8 = ssub.s32 1, %s6
  %s9 = scalar_select 0, %s8, %s6
  loop: start=0, step=1, limit=4
  $region2: #{dis_conv_forward.2} parent=0 // loop_pre_header
    _
  $region3: #{dis_conv_forward.2} parent=0 // loop_header
    %s11 = sphi 0, %s15
    %p12 = scmp.ge.s32.totalorder %s11, 4
    %s18 = sphi 0, %s30
    %s19 = sphi 0, %s26
    %s20 = sphi 0, %s18
    %s21 = sphi 0, %s19
    %s22 = sphi 0, %s20
    %s23 = sphi 0, %s21
    %s35 = sphi 0, %s37
    %s38 = sphi 0, %s35
    %s39 = sphi 0, %s38
    %s55 = sphi 0, %s39
    %s59 = sphi 0, %s59
    %s61 = sphi 0, %s59
    %s62 = sphi 0, %s61
    %s76 = sphi 0, %s62
    %s80 = sphi 0, %s80
    %s82 = sphi 0, %s80
    %s83 = sphi 0, %s82
    %s97 = sphi 0, %s83
    %s103 = sphi 0, %s105
    %s106 = sphi 0, %s103
    %s107 = sphi 0, %s106
    %s123 = sphi 0, %s107
    %s129 = sphi 0, %s131
    %s132 = sphi 0, %s129
    %s133 = sphi 0, %s132
    %s149 = sphi 0, %s133
  $region4: #{dis_conv_forward.2} parent=0 // loop_header_branch
    %14 = sbr.rel (%p12) target = $region8
  $region5: #{dis_conv_forward.2} parent=0 // loop_body
    %s16 = ssub.s32 %s11, 1
    %s17 = ssub.s32 %s11, 2
    %s24 = sadd.s32 1, %s19
    %p25 = scmp.ge.s32.totalorder %s24, 1
    %s26 = scalar_select %p25, 0, %s24
    %s27 = sadd.s32 1, %s18
    %s28 = scalar_select %p25, %s27, %s18
    %p29 = scmp.ge.s32.totalorder %s28, 2
    %s30 = scalar_select %p29, 0, %s28
    %s31 = ssub.s32 %s18, %s30
    %s32 = ssub.s32 %s19, %s26
    %s33 = sor.u32 %s31, %s32
    %p34 = scmp.eq.s32.totalorder %s33, 0
    %s36 = sadd.s32 %s35, 1
    %s37 = scalar_select %p34, %s35, %s36
    %p40 = pneg %p34
    %p41 = scmp.eq.s32.totalorder %s11, 1
    %p42 = por %p40, %p41
    %p43 = scmp.ne.s32.totalorder %s35, %s38
    %p44 = scmp.eq.s32.totalorder %s11, 0
    %p45 = por %p43, %p44
    %p46 = scmp.ne.s32.totalorder %s35, %s38
    %p47 = scmp.eq.s32.totalorder %s16, 1
    %p48 = por %p46, %p47
    %p49 = scmp.ne.s32.totalorder %s38, %s39
    %p50 = scmp.eq.s32.totalorder %s16, 0
    %p51 = por %p49, %p50
    %p52 = scmp.ne.s32.totalorder %s38, %s39
    %p53 = scmp.eq.s32.totalorder %s17, 1
    %p54 = por %p52, %p53
    %p56 = scmp.ne.s32.totalorder %s39, %s55
    %p57 = scmp.eq.s32.totalorder %s17, 0
    %p58 = por %p56, %p57
    %s60 = sadd.s32 %s59, 1
    %p63 = scmp.eq.s32.totalorder %s11, 1
    %p64 = scmp.ne.s32.totalorder %s59, %s61
    %p65 = scmp.eq.s32.totalorder %s11, 0
    %p66 = por %p64, %p65
    %p67 = scmp.ne.s32.totalorder %s59, %s61
    %p68 = scmp.eq.s32.totalorder %s16, 1
    %p69 = por %p67, %p68
    %p70 = scmp.ne.s32.totalorder %s61, %s62
    %p71 = scmp.eq.s32.totalorder %s16, 0
    %p72 = por %p70, %p71
    %p73 = scmp.ne.s32.totalorder %s61, %s62
    %p74 = scmp.eq.s32.totalorder %s17, 1
    %p75 = por %p73, %p74
    %p77 = scmp.ne.s32.totalorder %s62, %s76
    %p78 = scmp.eq.s32.totalorder %s17, 0
    %p79 = por %p77, %p78
    %s81 = sadd.s32 %s80, 1
    %p84 = scmp.eq.s32.totalorder %s11, 1
    %p85 = scmp.ne.s32.totalorder %s80, %s82
    %p86 = scmp.eq.s32.totalorder %s11, 0
    %p87 = por %p85, %p86
    %p88 = scmp.ne.s32.totalorder %s80, %s82
    %p89 = scmp.eq.s32.totalorder %s16, 1
    %p90 = por %p88, %p89
    %p91 = scmp.ne.s32.totalorder %s82, %s83
    %p92 = scmp.eq.s32.totalorder %s16, 0
    %p93 = por %p91, %p92
    %p94 = scmp.ne.s32.totalorder %s82, %s83
    %p95 = scmp.eq.s32.totalorder %s17, 1
    %p96 = por %p94, %p95
    %p98 = scmp.ne.s32.totalorder %s83, %s97
    %p99 = scmp.eq.s32.totalorder %s17, 0
    %p100 = por %p98, %p99
    %s101 = ssub.s32 %s18, %s30
    %p102 = scmp.eq.s32.totalorder %s101, 0
    %s104 = sadd.s32 %s103, 1
    %s105 = scalar_select %p102, %s103, %s104
    %p108 = pneg %p102
    %p109 = scmp.eq.s32.totalorder %s11, 1
    %p110 = por %p108, %p109
    %p111 = scmp.ne.s32.totalorder %s103, %s106
    %p112 = scmp.eq.s32.totalorder %s11, 0
    %p113 = por %p111, %p112
    %p114 = scmp.ne.s32.totalorder %s103, %s106
    %p115 = scmp.eq.s32.totalorder %s16, 1
    %p116 = por %p114, %p115
    %p117 = scmp.ne.s32.totalorder %s106, %s107
    %p118 = scmp.eq.s32.totalorder %s16, 0
    %p119 = por %p117, %p118
    %p120 = scmp.ne.s32.totalorder %s106, %s107
    %p121 = scmp.eq.s32.totalorder %s17, 1
    %p122 = por %p120, %p121
    %p124 = scmp.ne.s32.totalorder %s107, %s123
    %p125 = scmp.eq.s32.totalorder %s17, 0
    %p126 = por %p124, %p125
    %s127 = ssub.s32 %s18, %s30
    %p128 = scmp.eq.s32.totalorder %s127, 0
    %s130 = sadd.s32 %s129, 1
    %s131 = scalar_select %p128, %s129, %s130
    %p134 = pneg %p128
    %p135 = scmp.eq.s32.totalorder %s11, 1
    %p136 = por %p134, %p135
    %p137 = scmp.ne.s32.totalorder %s129, %s132
    %p138 = scmp.eq.s32.totalorder %s11, 0
    %p139 = por %p137, %p138
    %p140 = scmp.ne.s32.totalorder %s129, %s132
    %p141 = scmp.eq.s32.totalorder %s16, 1
    %p142 = por %p140, %p141
    %p143 = scmp.ne.s32.totalorder %s132, %s133
    %p144 = scmp.eq.s32.totalorder %s16, 0
    %p145 = por %p143, %p144
    %p146 = scmp.ne.s32.totalorder %s132, %s133
    %p147 = scmp.eq.s32.totalorder %s17, 1
    %p148 = por %p146, %p147
    %p150 = scmp.ne.s32.totalorder %s133, %s149
    %p151 = scmp.eq.s32.totalorder %s17, 0
    %p152 = por %p150, %p151
    %p153 = scmp.le.s32.totalorder 1, %s11
    %p154 = scmp.lt.s32.totalorder %s11, 3
    %p155 = pnand %p153, %p154
    %p156 = pneg %p155
    // Predicated region
    $region9: #{dis_conv_forward.2} parent=5 // pred_check
      _
    $region10: #{dis_conv_forward.2} parent=5 // pred_check_branch
      %158 = sbr.rel (%p155) target = $region12
    $region11: #{dis_conv_forward.2} parent=5 // pred_region
      %s159 = ssub.s32 %s11, 1
      // Predicated region
      $region13: #{dis_conv_forward.2} parent=11 // pred_check
        %p160 = pneg %p72
      $region14: #{dis_conv_forward.2} parent=11 // pred_check_branch
        %162 = sbr.rel (%p160) target = $region16
      $region15: #{dis_conv_forward.2} parent=11 // pred_region
        _
      $region16: #{dis_conv_forward.2} parent=11 // pred_fallthru
        _
      // Predicated region
      $region17: #{dis_conv_forward.2} parent=11 // pred_check
        %p163 = pneg %p93
      $region18: #{dis_conv_forward.2} parent=11 // pred_check_branch
        %165 = sbr.rel (%p163) target = $region20
      $region19: #{dis_conv_forward.2} parent=11 // pred_region
        _
      $region20: #{dis_conv_forward.2} parent=11 // pred_fallthru
        _
    $region12: #{dis_conv_forward.2} parent=5 // pred_fallthru
      _
    %p166 = scmp.lt.s32.totalorder %s11, 2
    // Predicated region
    $region21: #{dis_conv_forward.2} parent=5 // pred_check
      %p167 = pneg %p166
    $region22: #{dis_conv_forward.2} parent=5 // pred_check_branch
      %169 = sbr.rel (%p167) target = $region24
    $region23: #{dis_conv_forward.2} parent=5 // pred_region
      // Predicated region
      $region25: #{dis_conv_forward.2} parent=23 // pred_check
        %p170 = pneg %p45
      $region26: #{dis_conv_forward.2} parent=23 // pred_check_branch
        %172 = sbr.rel (%p170) target = $region28
      $region27: #{dis_conv_forward.2} parent=23 // pred_region
        %s173 = smul.u32 8, %s18
        %p174 = scmp.lt.s32.totalorder %s173, 15
        %s175 = scalar_select %p174, %s173, 15
        %p176 = scmp.lt.s32.totalorder %s19, 0
        %s177 = scalar_select %p176, %s19, 0
        %s178 = sadd.s32 %s177, %s175
        %s179 = smul.addr %s178, 4
        %s180 = scalar_lea.vmem %s0, %s179
        %s181 = smul.u32 8, %s18
      $region28: #{dis_conv_forward.2} parent=23 // pred_fallthru
        _
    $region24: #{dis_conv_forward.2} parent=5 // pred_fallthru
      _
    %p182 = scmp.le.s32.totalorder 1, %s11
    %p183 = scmp.lt.s32.totalorder %s11, 3
    %p184 = pnand %p182, %p183
    %p185 = pneg %p184
    // Predicated region
    $region29: #{dis_conv_forward.2} parent=5 // pred_check
      _
    $region30: #{dis_conv_forward.2} parent=5 // pred_check_branch
      %187 = sbr.rel (%p184) target = $region32
    $region31: #{dis_conv_forward.2} parent=5 // pred_region
      %s188 = ssub.s32 %s11, 1
      %s189 = smul.u32 8, %s20
      %p190 = scmp.lt.s32.totalorder %s189, 15
      %s191 = scalar_select %p190, %s189, 15
      %p192 = scmp.lt.s32.totalorder %s21, 0
      %s193 = scalar_select %p192, %s21, 0
      %s194 = sadd.s32 %s193, %s191
      %s195 = smul.addr %s194, 4
      %s196 = scalar_lea.vmem %s0, %s195
      %p197 = pneg %p51
      %p198 = pneg %p48
      %p199 = pneg %p72
      %p200 = pneg %p69
      %p201 = pneg %p93
      %p202 = pneg %p90
      %p203 = pneg %p119
      %p204 = pneg %p116
      %s205 = smul.u32 8, %s20
      %p206 = scmp.lt.s32.totalorder %s205, 15
      %s207 = scalar_select %p206, %s205, 15
      %s208 = smul.addr %s207, 4
      %s209 = scalar_lea.vmem %s3, %s208
      %p210 = pneg %p145
      %p211 = pneg %p142
      %p212 = scmp.lt.s32.totalorder %s20, 1
      %s213 = scalar_select %p212, %s20, 1
      %s214 = smul.addr %s213, 8
      %s215 = scalar_lea.vmem %s4, %s214
      %s216 = smul.u32 8, %s20
      %p217 = scmp.lt.s32.totalorder %s216, 15
      %s218 = scalar_select %p217, %s216, 15
      %p219 = scmp.lt.s32.totalorder %s21, 0
      %s220 = scalar_select %p219, %s21, 0
      %s221 = sadd.s32 %s220, %s218
      %s222 = smul.addr %s221, 4
      %s223 = scalar_lea.vmem %s0, %s222
      %s224 = smul.u32 8, %s20
      %s225 = smul.u32 8, %s20
      %p226 = scmp.lt.s32.totalorder %s225, 15
      %s227 = scalar_select %p226, %s225, 15
      %s228 = smul.addr %s227, 4
      %s229 = scalar_lea.vmem %s3, %s228
      %s230 = smul.u32 8, %s20
      %p231 = scmp.lt.s32.totalorder %s20, 1
      %s232 = scalar_select %p231, %s20, 1
      %s233 = smul.addr %s232, 8
      %s234 = scalar_lea.vmem %s4, %s233
      %p236 = scmp.eq.s32.totalorder %s21, 0
      // Predicated region
      $region33: #{dis_conv_forward.2} parent=31 // pred_check
        %p237 = pneg %p236
      $region34: #{dis_conv_forward.2} parent=31 // pred_check_branch
        %239 = sbr.rel (%p237) target = $region36
      $region35: #{dis_conv_forward.2} parent=31 // pred_region
        %vm240 = vcmask 64512
        %241 = vst.msk [vmem:[#allocation2] sm:$0xff] %vm240, 0.0
        %242 = vst.msk [vmem:[#allocation2 + $0x8] sm:$0xff] %vm240, 0.0
        %243 = vst.msk [vmem:[#allocation2 + $0x10] sm:$0xff] %vm240, 0.0
        %244 = vst.msk [vmem:[#allocation2 + $0x18] sm:$0xff] %vm240, 0.0
        %245 = vst.msk [vmem:[#allocation2 + $0x20] sm:$0xff] %vm240, 0.0
        %246 = vst.msk [vmem:[#allocation2 + $0x28] sm:$0xff] %vm240, 0.0
        %247 = vst.msk [vmem:[#allocation2 + $0x30] sm:$0xff] %vm240, 0.0
        %248 = vst.msk [vmem:[#allocation2 + $0x38] sm:$0xff] %vm240, 0.0
      $region36: #{dis_conv_forward.2} parent=31 // pred_fallthru
        _
      %v249 = vld [vmem:[%s1] sm:$0xf]
      %v250 = vld [vmem:[%s1 + $0x4] sm:$0xf]
      %v251 = vld [vmem:[%s1 + $0x8] sm:$0xf]
      %v252 = vld [vmem:[%s1 + $0xc] sm:$0xf]
      %v253 = vld [vmem:[%s1 + $0x10] sm:$0xf]
      %v254 = vld [vmem:[%s1 + $0x14] sm:$0xf]
      %v255 = vld [vmem:[%s1 + $0x18] sm:$0xf]
      %v256 = vld [vmem:[%s1 + $0x1c] sm:$0xf]
      %v257 = vld [vmem:[%s1 + $0x20] sm:$0xf]
      %v258 = vld [vmem:[%s1 + $0x24] sm:$0xf]
      %v259 = vld [vmem:[%s1 + $0x28] sm:$0xf]
      %v260 = vld [vmem:[%s1 + $0x2c] sm:$0xf]
      %v261 = vld [vmem:[%s1 + $0x30] sm:$0xf]
      %v262 = vld [vmem:[%s1 + $0x34] sm:$0xf]
      %v263 = vld [vmem:[%s1 + $0x38] sm:$0xf]
      %v264 = vld [vmem:[%s1 + $0x3c] sm:$0xf]
      %v265 = vld [vmem:[#allocation2] sm:$0xff]
      %v266 = vld [vmem:[#allocation2 + $0x8] sm:$0xff]
      %v267 = vld [vmem:[#allocation2 + $0x10] sm:$0xff]
      %v268 = vld [vmem:[#allocation2 + $0x18] sm:$0xff]
      %v269 = vld [vmem:[#allocation2 + $0x20] sm:$0xff]
      %v270 = vld [vmem:[#allocation2 + $0x28] sm:$0xff]
      %v271 = vld [vmem:[#allocation2 + $0x30] sm:$0xff]
      %v272 = vld [vmem:[#allocation2 + $0x38] sm:$0xff]
      %v273 = vld [vmem:[%s223] sm:$0xf]
      %v274 = vld [vmem:[%s223 + $0x4] sm:$0xf]
      %v275 = vld [vmem:[%s223 + $0x8] sm:$0xf]
      %v276 = vld [vmem:[%s223 + $0xc] sm:$0xf]
      %v277 = vld [vmem:[%s223 + $0x10] sm:$0xf]
      %v278 = vld [vmem:[%s223 + $0x14] sm:$0xf]
      %v279 = vld [vmem:[%s223 + $0x18] sm:$0xf]
      %v280 = vld [vmem:[%s223 + $0x1c] sm:$0xf]
      %v289 = vunpack.c.l.b16 %v273
      %v290 = vunpack.c.l.b16 %v274
      %v291 = vunpack.c.l.b16 %v275
      %v292 = vunpack.c.l.b16 %v276
      %v293 = vunpack.c.l.b16 %v277
      %v294 = vunpack.c.l.b16 %v278
      %v295 = vunpack.c.l.b16 %v279
      %v296 = vunpack.c.l.b16 %v280
      %v297 = vpack.c.b16 %v290, %v289
      %v298 = vpack.c.b16 %v292, %v291
      %v299 = vpack.c.b16 %v294, %v293
      %v300 = vpack.c.b16 %v296, %v295
      %v321 = vunpack.c.l.b16 %v249
      %v322 = vunpack.c.l.b16 %v250
      %v323 = vunpack.c.l.b16 %v251
      %v324 = vunpack.c.l.b16 %v252
      %v325 = vunpack.c.l.b16 %v253
      %v326 = vunpack.c.l.b16 %v254
      %v327 = vunpack.c.l.b16 %v255
      %v328 = vunpack.c.l.b16 %v256
      %v329 = vunpack.c.l.b16 %v257
      %v330 = vunpack.c.l.b16 %v258
      %v331 = vunpack.c.l.b16 %v259
      %v332 = vunpack.c.l.b16 %v260
      %v333 = vunpack.c.l.b16 %v261
      %v334 = vunpack.c.l.b16 %v262
      %v335 = vunpack.c.l.b16 %v263
      %v336 = vunpack.c.l.b16 %v264
      %v337 = vpack.c.b16 %v322, %v321
      %v338 = vpack.c.b16 %v324, %v323
      %v339 = vpack.c.b16 %v326, %v325
      %v340 = vpack.c.b16 %v328, %v327
      %v341 = vpack.c.b16 %v330, %v329
      %v342 = vpack.c.b16 %v332, %v331
      %v343 = vpack.c.b16 %v334, %v333
      %v344 = vpack.c.b16 %v336, %v335
      %353 = vmatprep.subr.bf16.mxu0 0
      %354 = vmatpush1.bf16.msra.mxu0 %v337
      %355 = vmatprep.subr.bf16.mxu0 0
      %356 = vmatpush1.bf16.msra.mxu0 %v338
      %357 = vmatprep.subr.bf16.mxu0 0
      %358 = vmatpush1.bf16.msra.mxu0 %v339
      %359 = vmatprep.subr.bf16.mxu0 0
      %360 = vmatpush1.bf16.msra.mxu0 %v340
      %361 = vmatprep.subr.bf16.mxu0 0
      %362 = vmatpush1.bf16.msra.mxu0 %v341
      %363 = vmatprep.subr.bf16.mxu0 0
      %364 = vmatpush1.bf16.msra.mxu0 %v342
      %365 = vmatprep.subr.bf16.mxu0 0
      %366 = vmatpush1.bf16.msra.mxu0 %v343
      %367 = vmatprep.subr.bf16.mxu0 0
      %368 = vmatpush1.bf16.msra.mxu0 %v344
      %369 = vmatprep.subr.bf16.mxu0 0
      %370 = vmatpush1.bf16.msra.mxu0 0
      %371 = vmatprep.subr.bf16.mxu0 0
      %372 = vmatpush1.bf16.msra.mxu0 0
      %373 = vmatprep.subr.bf16.mxu0 0
      %374 = vmatpush1.bf16.msra.mxu0 0
      %375 = vmatprep.subr.bf16.mxu0 0
      %376 = vmatpush1.bf16.msra.mxu0 0
      %377 = vmatprep.subr.bf16.mxu0 0
      %378 = vmatpush1.bf16.msra.mxu0 0
      %379 = vmatprep.subr.bf16.mxu0 0
      %380 = vmatpush1.bf16.msra.mxu0 0
      %381 = vmatprep.subr.bf16.mxu0 0
      %382 = vmatpush1.bf16.msra.mxu0 0
      %383 = vmatprep.subr.bf16.mxu0 0
      %384 = vmatpush1.bf16.msra.mxu0 0
      %385 = vmatprep.mubr.bf16.mxu0 0
      %386 = vmatmul.mubr.bf16.gmra.mrb[0].mxu0 %v297
      %v387 = vpop.f32.mrb[0].mxu0
      %v388 = vadd.f32 0.0, %v387
      %v389 = vpop.f32.mrb[0].mxu0
      %v390 = vpop.f32.mrb[0].mxu0
      %v391 = vadd.f32 0.0, %v390
      %v392 = vpop.f32.mrb[0].mxu0
      %393 = vmatprep.mubr.bf16.mxu0 0
      %394 = vmatmul.mubr.bf16.gmra.mrb[0].mxu0 %v298
      %v395 = vpop.f32.mrb[0].mxu0
      %v396 = vadd.f32 0.0, %v395
      %v397 = vpop.f32.mrb[0].mxu0
      %v398 = vpop.f32.mrb[0].mxu0
      %v399 = vadd.f32 0.0, %v398
      %v400 = vpop.f32.mrb[0].mxu0
      %401 = vmatprep.mubr.bf16.mxu0 0
      %402 = vmatmul.mubr.bf16.gmra.mrb[0].mxu0 %v299
      %v403 = vpop.f32.mrb[0].mxu0
      %v404 = vadd.f32 0.0, %v403
      %v405 = vpop.f32.mrb[0].mxu0
      %v406 = vpop.f32.mrb[0].mxu0
      %v407 = vadd.f32 0.0, %v406
      %v408 = vpop.f32.mrb[0].mxu0
      %409 = vmatprep.mubr.bf16.mxu0 0
      %410 = vmatmul.mubr.bf16.gmra.mrb[0].mxu0 %v300
      %v411 = vpop.f32.mrb[0].mxu0
      %v412 = vadd.f32 0.0, %v411
      %v413 = vpop.f32.mrb[0].mxu0
      %v414 = vpop.f32.mrb[0].mxu0
      %v415 = vadd.f32 0.0, %v414
      %v416 = vpop.f32.mrb[0].mxu0
      %417 = vdwg.mxu0
      %v418 = vadd.f32 %v265, %v388
      %v419 = vadd.f32 %v266, %v391
      %v420 = vadd.f32 %v267, %v396
      %v421 = vadd.f32 %v268, %v399
      %v422 = vadd.f32 %v269, %v404
      %v423 = vadd.f32 %v270, %v407
      %v424 = vadd.f32 %v271, %v412
      %v425 = vadd.f32 %v272, %v415
      %vm426 = vcmask 64512
      %427 = vst.msk [vmem:[#allocation2] sm:$0xff] %vm426, %v418
      %428 = vst.msk [vmem:[#allocation2 + $0x8] sm:$0xff] %vm426, %v419
      %429 = vst.msk [vmem:[#allocation2 + $0x10] sm:$0xff] %vm426, %v420
      %430 = vst.msk [vmem:[#allocation2 + $0x18] sm:$0xff] %vm426, %v421
      %431 = vst.msk [vmem:[#allocation2 + $0x20] sm:$0xff] %vm426, %v422
      %432 = vst.msk [vmem:[#allocation2 + $0x28] sm:$0xff] %vm426, %v423
      %433 = vst.msk [vmem:[#allocation2 + $0x30] sm:$0xff] %vm426, %v424
      %434 = vst.msk [vmem:[#allocation2 + $0x38] sm:$0xff] %vm426, %v425
      // Predicated region
      $region37: #{dis_conv_forward.2} parent=31 // pred_check
        %p435 = pneg %p236
      $region38: #{dis_conv_forward.2} parent=31 // pred_check_branch
        %437 = sbr.rel (%p435) target = $region40
      $region39: #{dis_conv_forward.2} parent=31 // pred_region
        %v438 = vld [vmem:[#allocation2] sm:$0xff]
        %v439 = vld [vmem:[#allocation2 + $0x8] sm:$0xff]
        %v440 = vld [vmem:[#allocation2 + $0x10] sm:$0xff]
        %v441 = vld [vmem:[#allocation2 + $0x18] sm:$0xff]
        %v442 = vld [vmem:[#allocation2 + $0x20] sm:$0xff]
        %v443 = vld [vmem:[#allocation2 + $0x28] sm:$0xff]
        %v444 = vld [vmem:[#allocation2 + $0x30] sm:$0xff]
        %v445 = vld [vmem:[#allocation2 + $0x38] sm:$0xff]
        %v446 = vld [vmem:[%s2] sm:$0x1]
        %v448 = vlaneseq
        %v449 = vshrl.u32 %v448, 7
        %v450 = vsub.s32 0, %v449
        %v451 = vrot.slane %v446, %v450
        %v453 = vadd.f32 %v438, %v451
        %v454 = vadd.f32 %v439, %v451
        %v455 = vadd.f32 %v440, %v451
        %v456 = vadd.f32 %v441, %v451
        %v457 = vadd.f32 %v442, %v451
        %v458 = vadd.f32 %v443, %v451
        %v459 = vadd.f32 %v444, %v451
        %v460 = vadd.f32 %v445, %v451
        %v461 = vpack.c.bf16 %v454, %v453
        %v462 = vpack.c.bf16 %v456, %v455
        %v463 = vpack.c.bf16 %v458, %v457
        %v464 = vpack.c.bf16 %v460, %v459
        %v469 = vunpack.c.l.b16 %v461
        %v470 = vunpack.c.h.b16 %v461
        %v471 = vunpack.c.l.b16 %v462
        %v472 = vunpack.c.h.b16 %v462
        %v473 = vunpack.c.l.b16 %v463
        %v474 = vunpack.c.h.b16 %v463
        %v475 = vunpack.c.l.b16 %v464
        %v476 = vunpack.c.h.b16 %v464
        %v477 = vpack.c.b16 %v469, %v469
        %v478 = vpack.c.b16 %v470, %v470
        %v479 = vpack.c.b16 %v471, %v471
        %v480 = vpack.c.b16 %v472, %v472
        %v481 = vpack.c.b16 %v473, %v473
        %v482 = vpack.c.b16 %v474, %v474
        %v483 = vpack.c.b16 %v475, %v475
        %v484 = vpack.c.b16 %v476, %v476
        %vm493 = vcmask 60416
        %494 = vst.msk [vmem:[%s229] sm:$0xf] %vm493, %v477
        %495 = vst.msk [vmem:[%s229 + $0x4] sm:$0xf] %vm493, %v478
        %496 = vst.msk [vmem:[%s229 + $0x8] sm:$0xf] %vm493, %v479
        %497 = vst.msk [vmem:[%s229 + $0xc] sm:$0xf] %vm493, %v480
        %498 = vst.msk [vmem:[%s229 + $0x10] sm:$0xf] %vm493, %v481
        %499 = vst.msk [vmem:[%s229 + $0x14] sm:$0xf] %vm493, %v482
        %500 = vst.msk [vmem:[%s229 + $0x18] sm:$0xf] %vm493, %v483
        %501 = vst.msk [vmem:[%s229 + $0x1c] sm:$0xf] %vm493, %v484
        %s502 = smul.u32 %s20, 64
        %v503 = vlaneseq
        %v504 = vshrl.u32 %v503, 7
        %v505 = vadd.s32 %v504, 8
        %v506 = vadd.s32 %v504, 16
        %v507 = vadd.s32 %v504, 24
        %v508 = vadd.s32 %v504, 32
        %v509 = vadd.s32 %v504, 40
        %v510 = vadd.s32 %v504, 48
        %v511 = vadd.s32 %v504, 56
        %v512 = vstv %s502
        %v513 = vadd.s32 %v512, %v504
        %v514 = vadd.s32 %v512, %v505
        %v515 = vadd.s32 %v512, %v506
        %v516 = vadd.s32 %v512, %v507
        %v517 = vadd.s32 %v512, %v508
        %v518 = vadd.s32 %v512, %v509
        %v519 = vadd.s32 %v512, %v510
        %v520 = vadd.s32 %v512, %v511
        %vm521 = vcmp.lt.s32.totalorder %v513, 128
        %vm522 = vcmp.lt.s32.totalorder %v514, 128
        %vm523 = vcmp.lt.s32.totalorder %v515, 128
        %vm524 = vcmp.lt.s32.totalorder %v516, 128
        %vm525 = vcmp.lt.s32.totalorder %v517, 128
        %vm526 = vcmp.lt.s32.totalorder %v518, 128
        %vm527 = vcmp.lt.s32.totalorder %v519, 128
        %vm528 = vcmp.lt.s32.totalorder %v520, 128
        %v529 = vsel %vm521, 1, 0
        %v530 = vsel %vm522, 1, 0
        %v531 = vsel %vm523, 1, 0
        %v532 = vsel %vm524, 1, 0
        %v533 = vsel %vm525, 1, 0
        %v534 = vsel %vm526, 1, 0
        %v535 = vsel %vm527, 1, 0
        %v536 = vsel %vm528, 1, 0
        %v537 = vcvt.s32.f32 %v529
        %v538 = vcvt.s32.f32 %v530
        %v539 = vcvt.s32.f32 %v531
        %v540 = vcvt.s32.f32 %v532
        %v541 = vcvt.s32.f32 %v533
        %v542 = vcvt.s32.f32 %v534
        %v543 = vcvt.s32.f32 %v535
        %v544 = vcvt.s32.f32 %v536
        %v545 = vmul.f32 %v453, %v537
        %v546 = vmul.f32 %v454, %v538
        %v547 = vmul.f32 %v455, %v539
        %v548 = vmul.f32 %v456, %v540
        %v549 = vmul.f32 %v457, %v541
        %v550 = vmul.f32 %v458, %v542
        %v551 = vmul.f32 %v459, %v543
        %v552 = vmul.f32 %v460, %v544
        %v553 = vsel %vm426, %v545, 0.0
        %v554 = vsel %vm426, %v546, 0.0
        %v555 = vadd.f32 %v553, %v554
        %v556 = vsel %vm426, %v547, 0.0
        %v557 = vadd.f32 %v555, %v556
        %v558 = vsel %vm426, %v548, 0.0
        %v559 = vadd.f32 %v557, %v558
        %v560 = vsel %vm426, %v549, 0.0
        %v561 = vadd.f32 %v559, %v560
        %v562 = vsel %vm426, %v550, 0.0
        %v563 = vadd.f32 %v561, %v562
        %v564 = vsel %vm426, %v551, 0.0
        %v565 = vadd.f32 %v563, %v564
        %v566 = vsel %vm426, %v552, 0.0
        %v567 = vadd.f32 %v565, %v566
        %v568 = vrot.slane %v567, 4
        %v569 = vadd.f32 %v567, %v568
        %v570 = vrot.slane %v569, 2
        %v571 = vadd.f32 %v569, %v570
        %v572 = vrot.slane %v571, 1
        %v573 = vadd.f32 %v571, %v572
        %v574 = vmul.f32 %v545, %v545
        %v575 = vmul.f32 %v546, %v546
        %v576 = vmul.f32 %v547, %v547
        %v577 = vmul.f32 %v548, %v548
        %v578 = vmul.f32 %v549, %v549
        %v579 = vmul.f32 %v550, %v550
        %v580 = vmul.f32 %v551, %v551
        %v581 = vmul.f32 %v552, %v552
        %v582 = vsel %vm426, %v574, 0.0
        %v583 = vsel %vm426, %v575, 0.0
        %v584 = vadd.f32 %v582, %v583
        %v585 = vsel %vm426, %v576, 0.0
        %v586 = vadd.f32 %v584, %v585
        %v587 = vsel %vm426, %v577, 0.0
        %v588 = vadd.f32 %v586, %v587
        %v589 = vsel %vm426, %v578, 0.0
        %v590 = vadd.f32 %v588, %v589
        %v591 = vsel %vm426, %v579, 0.0
        %v592 = vadd.f32 %v590, %v591
        %v593 = vsel %vm426, %v580, 0.0
        %v594 = vadd.f32 %v592, %v593
        %v595 = vsel %vm426, %v581, 0.0
        %v596 = vadd.f32 %v594, %v595
        %v597 = vrot.slane %v596, 4
        %v598 = vadd.f32 %v596, %v597
        %v599 = vrot.slane %v598, 2
        %v600 = vadd.f32 %v598, %v599
        %v601 = vrot.slane %v600, 1
        %v602 = vadd.f32 %v600, %v601
        %vm603 = vcmp.eq.s32.totalorder %v504, 0
        %vm604 = vcmp.eq.s32.totalorder %v504, 1
        %v605 = vsel %vm604, 1, 0
        %vm606 = vcmp.eq.s32.totalorder %v605, 1
        %v607 = vsel %vm606, %v602, 0.0
        %v608 = vsel %vm603, 1, 0
        %vm609 = vcmp.eq.s32.totalorder %v608, 1
        %v610 = vsel %vm609, %v573, %v607
        %611 = vst.msk [vmem:[%s234] sm:$0xff] %vm426, %v610
      $region40: #{dis_conv_forward.2} parent=31 // pred_fallthru
        _
      %s612 = smul.u32 8, %s20
      %p613 = scmp.lt.s32.totalorder %s612, 15
      %s614 = scalar_select %p613, %s612, 15
      %s615 = smul.addr %s614, 4
      %s616 = scalar_lea.vmem %s3, %s615
      %p617 = scmp.lt.s32.totalorder %s20, 1
      %s618 = scalar_select %p617, %s20, 1
      %s619 = smul.addr %s618, 8
      %s620 = scalar_lea.vmem %s4, %s619
      // Predicated region
      $region41: #{dis_conv_forward.2} parent=31 // pred_check
        %p621 = pneg %p116
      $region42: #{dis_conv_forward.2} parent=31 // pred_check_branch
        %623 = sbr.rel (%p621) target = $region44
      $region43: #{dis_conv_forward.2} parent=31 // pred_region
        %s624 = smul.u32 8, %s20
      $region44: #{dis_conv_forward.2} parent=31 // pred_fallthru
        _
      // Predicated region
      $region45: #{dis_conv_forward.2} parent=31 // pred_check
        %p625 = pneg %p142
      $region46: #{dis_conv_forward.2} parent=31 // pred_check_branch
        %627 = sbr.rel (%p625) target = $region48
      $region47: #{dis_conv_forward.2} parent=31 // pred_region
        _
      $region48: #{dis_conv_forward.2} parent=31 // pred_fallthru
        _
    $region32: #{dis_conv_forward.2} parent=5 // pred_fallthru
      _
    %p628 = scmp.le.s32.totalorder 2, %s11
    // Predicated region
    $region49: #{dis_conv_forward.2} parent=5 // pred_check
      %p629 = pneg %p628
    $region50: #{dis_conv_forward.2} parent=5 // pred_check_branch
      %631 = sbr.rel (%p629) target = $region52
    $region51: #{dis_conv_forward.2} parent=5 // pred_region
      %s632 = ssub.s32 %s11, 2
      // Predicated region
      $region53: #{dis_conv_forward.2} parent=51 // pred_check
        %p633 = pneg %p122
      $region54: #{dis_conv_forward.2} parent=51 // pred_check_branch
        %635 = sbr.rel (%p633) target = $region56
      $region55: #{dis_conv_forward.2} parent=51 // pred_region
        %s636 = smul.u32 8, %s22
        %p637 = scmp.lt.s32.totalorder %s636, 15
        %s638 = scalar_select %p637, %s636, 15
        %s639 = smul.addr %s638, 4
        %s640 = scalar_lea.vmem %s3, %s639
      $region56: #{dis_conv_forward.2} parent=51 // pred_fallthru
        _
      // Predicated region
      $region57: #{dis_conv_forward.2} parent=51 // pred_check
        %p641 = pneg %p148
      $region58: #{dis_conv_forward.2} parent=51 // pred_check_branch
        %643 = sbr.rel (%p641) target = $region60
      $region59: #{dis_conv_forward.2} parent=51 // pred_region
        %p644 = scmp.lt.s32.totalorder %s22, 1
        %s645 = scalar_select %p644, %s22, 1
        %s646 = smul.addr %s645, 8
        %s647 = scalar_lea.vmem %s4, %s646
      $region60: #{dis_conv_forward.2} parent=51 // pred_fallthru
        _
    $region52: #{dis_conv_forward.2} parent=5 // pred_fallthru
      _
  $region6: #{dis_conv_forward.2} parent=0 // loop_footer
    %s15 = sadd.s32 1, %s11
  $region7: #{dis_conv_forward.2} parent=0 // loop_footer_branch
    %10 = sbr.rel target = $region3
  $region8: #{dis_conv_forward.2} parent=0 // loop_exit
    _

</llo_original>
